<compile_context>
chip_gen: v6e
topology: v6e:2x2x1
jax: 0.10.0
libtpu: 0.0.40
codegen_flags: <defaults>
</compile_context>

<pallas_src>
import functools
import math

import jax
import jax.numpy as jnp
from jax.experimental import pallas as pl
from jax.experimental.pallas import tpu as pltpu


def _rff_kernel(pos_ref, b_ref, phase_ref, out_ref):
    """pos_ref:   [tm, K]   packed field columns (K = pack * F_pad)
    b_ref:     [K, W]    block-diagonal B in [sin|cos]*pack output order
    phase_ref: [1, W]    0 on sin lanes, pi/2 on cos lanes
    out_ref:   [tm, W]   W = pack * D (128 lanes when pack folds rows)
    """
    pos = pos_ref[...].astype(jnp.float32)                     # [tm, K]
    proj = jnp.dot(pos, b_ref[...],                            # MXU, tiny K
                   preferred_element_type=jnp.float32,
                   precision=jax.lax.Precision.HIGHEST)        # [tm, W]
    # cos(x) == sin(x + pi/2): one full-vreg transcendental, one dense store.
    out_ref[...] = jnp.sin(proj + phase_ref[...]).astype(out_ref.dtype)


def _sublane_multiple(dtype) -> int:
    # f32 -> 8, bf16 -> 16, int8/fp8 -> 32
    return max(8, 32 // jnp.dtype(dtype).itemsize)


def _round_up(x: int, m: int) -> int:
    return ((x + m - 1) // m) * m


@functools.partial(jax.jit, static_argnames=("block_rows", "out_dtype"))
def random_fourier_feature_encode(field_arrays, B, *, block_rows=None,
                                  out_dtype=None):
    """field_arrays: tuple of F arrays with identical leading shape [...].
    B: [F, D/2]. Returns [..., D] = [sin(pos@B), cos(pos@B)]."""
    field_arrays = tuple(field_arrays)
    F = len(field_arrays)
    lead = field_arrays[0].shape
    N = math.prod(lead) if lead else 1
    half = B.shape[-1]
    D = 2 * half
    if out_dtype is None:
        out_dtype = jnp.result_type(*(a.dtype for a in field_arrays), B.dtype)

    # Lane-dense output packing: fold `pack` consecutive rows into one
    # 128-lane output row whenever D is narrower than a vreg.
    pack = 128 // D if (D < 128 and 128 % D == 0) else 1
    W = pack * D                                   # output row width (lanes)

    # Pad the contraction width so K = pack * F_pad is a sublane multiple.
    g = 8 // math.gcd(pack, 8)
    F_pad = _round_up(F, g)
    K = pack * F_pad

    # ---- wrapper-side staging (cheap vs. the [N, D] output) ---------------
    N_pad = _round_up(N, pack)
    pos = jnp.stack([a.reshape(N) for a in field_arrays], axis=-1)   # [N, F]
    pos = jnp.pad(pos, ((0, N_pad - N), (0, F_pad - F)))
    n_rows_p = N_pad // pack
    pos = pos.reshape(n_rows_p, K)                 # row-major fold of `pack` rows

    # Block-diagonal B in the packed [sin|cos] output order:
    #   b_exp[p*F_pad + f, q*D + j] = B[f, j % half] if p == q else 0.
    b32 = jnp.pad(B.astype(jnp.float32), ((0, F_pad - F), (0, 0)))
    b_sc = jnp.concatenate([b32, b32], axis=-1)                       # [F_pad, D]
    b_exp = jnp.einsum("pq,fd->pfqd",
                       jnp.eye(pack, dtype=jnp.float32), b_sc).reshape(K, W)
    # Per-lane phase: 0 on the sin half, pi/2 on the cos half of each segment.
    phase = jnp.tile(
        jnp.concatenate([jnp.zeros((half,), jnp.float32),
                         jnp.full((half,), jnp.pi / 2, jnp.float32)]),
        pack).reshape(1, W)

    # ---- VMEM-aware row-tile sizing (lane-padded, double-buffered) --------
    in_itemsize = jnp.dtype(pos.dtype).itemsize
    out_itemsize = jnp.dtype(out_dtype).itemsize
    sub = max(_sublane_multiple(pos.dtype), _sublane_multiple(out_dtype))
    if block_rows is not None:
        tm = max(1, int(block_rows) // pack)
    else:
        # Minor dims pad to 128 lanes in VMEM; account for it explicitly.
        bytes_per_row = 2 * (_round_up(K, 128) * in_itemsize
                             + _round_up(W, 128) * out_itemsize)
        tm = (8 * 1024 * 1024) // max(bytes_per_row, 1)   # ~8 MiB working set
        tm = min(tm, 4096)
        # v7x megacore: keep >= ~4 grid steps when there is enough data, but
        # never shrink tiles below ~512 packed rows.
        if n_rows_p > 1024:
            tm = min(tm, max(512, pl.cdiv(n_rows_p, 4)))
    tm = max(sub, _round_up(min(tm, n_rows_p), sub))

    grid = (pl.cdiv(n_rows_p, tm),)

    out = pl.pallas_call(
        _rff_kernel,
        out_shape=jax.ShapeDtypeStruct((n_rows_p, W), out_dtype),
        grid_spec=pltpu.PrefetchScalarGridSpec(
            num_scalar_prefetch=0,
            grid=grid,
            in_specs=[
                pl.BlockSpec((tm, K), lambda i: (i, 0)),    # packed pos tile
                pl.BlockSpec((K, W), lambda i: (0, 0)),     # b_exp (resident)
                pl.BlockSpec((1, W), lambda i: (0, 0)),     # phase (resident)
            ],
            out_specs=pl.BlockSpec((tm, W), lambda i: (i, 0)),
        ),
        compiler_params=pltpu.CompilerParams(
            dimension_semantics=("parallel",),
        ),
    )(pos, b_exp, phase)

    out = out.reshape(N_pad, D)[:N]
    return out.reshape(*lead, D)


class RandomFourierFeatureEncoder:
    """JAX/Pallas re-implementation of the PyTorch module's forward pass."""

    def __init__(self, input_name, fields, dim, sigma=10.0, key=None):
        assert dim % 2 == 0, "Embedding dimension must be divisible by 2."
        self.input_name = input_name
        self.fields = list(fields)
        self.dim = dim
        self.encoding_dim = dim // 2
        if key is None:
            key = jax.random.PRNGKey(0)
        # Matches torch.randn([F, D/2]) * sigma (deterministic JAX init).
        self.B = (jax.random.normal(
            key, (len(self.fields), self.encoding_dim), dtype=jnp.float32) * sigma)

    def __call__(self, inputs, *, block_rows=None, out_dtype=None):
        fields = tuple(inputs[f"{self.input_name}_{f}"] for f in self.fields)
        return random_fourier_feature_encode(fields, self.B,
                                              block_rows=block_rows,
                                              out_dtype=out_dtype)


if __name__ == "__main__":
    key = jax.random.PRNGKey(0)
    k_b, k_x = jax.random.split(key)

    fields = ["x", "y", "z", "t"]   # F = 4
    dim = 64                        # encoding_dim = 32, pack = 2
    enc = RandomFourierFeatureEncoder("hit", fields, dim, sigma=10.0, key=k_b)

    def reference(inputs):
        pos = jnp.stack([inputs[f"hit_{f}"] for f in fields], axis=-1)
        proj = jnp.dot(pos, enc.B, precision=jax.lax.Precision.HIGHEST)
        return jnp.concatenate([jnp.sin(proj), jnp.cos(proj)], axis=-1)

    # Case 1: small [batch, seq] inputs, lane-dense packed output (pack=2).
    batch, seq = 2, 8
    field_keys = jax.random.split(k_x, len(fields))
    inputs = {
        f"hit_{f}": jax.random.normal(fk, (batch, seq), dtype=jnp.float32)
        for f, fk in zip(fields, field_keys)
    }
    out = jax.block_until_ready(enc(inputs))
    ref = reference(inputs)
    assert out.shape == (batch, seq, dim), out.shape
    assert jnp.allclose(out, ref, atol=1e-3, rtol=1e-3), "case 1 mismatch vs reference"

    # Case 2: odd row count (row-padded to a pack multiple, still lane-dense)
    # with an explicit small row tile -> multi-step grid and a partial last tile.
    batch2, seq2 = 1, 601
    field_keys2 = jax.random.split(jax.random.PRNGKey(1), len(fields))
    inputs2 = {
        f"hit_{f}": jax.random.normal(fk, (batch2, seq2), dtype=jnp.float32)
        for f, fk in zip(fields, field_keys2)
    }
    out2 = jax.block_until_ready(enc(inputs2, block_rows=256))
    ref2 = reference(inputs2)
    assert out2.shape == (batch2, seq2, dim), out2.shape
    assert jnp.allclose(out2, ref2, atol=1e-3, rtol=1e-3), "case 2 mismatch vs reference"

    # Case 3: bf16 output path (halves writeback traffic; math stays f32).
    out3 = jax.block_until_ready(enc(inputs, out_dtype=jnp.bfloat16))
    assert out3.dtype == jnp.bfloat16
    assert jnp.allclose(out3.astype(jnp.float32), ref, atol=2e-2, rtol=2e-2), \
        "case 3 mismatch vs reference"

    print("KERNEL_OK")
</pallas_src>

<mosaic_0001>
module attributes {stable_mosaic.version = 11 : i64} {
  func.func @_rff_kernel(%arg0: i32, %arg1: memref<8x8xf32, #tpu.memory_space<vmem>>, %arg2: memref<8x128xf32, #tpu.memory_space<vmem>>, %arg3: memref<1x128xf32, #tpu.memory_space<vmem>>, %arg4: memref<8x128xf32, #tpu.memory_space<vmem>>) attributes {dimension_semantics = [#tpu.dimension_semantics<parallel>], iteration_bounds = array<i64: 1>, scalar_prefetch = 0 : i64, scratch_operands = 0 : i64, tpu.core_type = #tpu.core_type<tc>, window_params = [{transform_indices = @transform_0, window_bounds = array<i64: 8, 8>}, {pipeline_mode = #tpu.pipeline_mode<synchronous>, transform_indices = @transform_1, window_bounds = array<i64: 8, 128>}, {pipeline_mode = #tpu.pipeline_mode<synchronous>, transform_indices = @transform_2, window_bounds = array<i64: 1, 128>}, {transform_indices = @transform_3, window_bounds = array<i64: 8, 128>}]} {
    %c0 = arith.constant 0 : index
    %c0_0 = arith.constant 0 : index
    %0 = vector.load %arg1[%c0, %c0_0] : memref<8x8xf32, #tpu.memory_space<vmem>>, vector<8x8xf32>
    %c0_1 = arith.constant 0 : index
    %c0_2 = arith.constant 0 : index
    %1 = vector.load %arg2[%c0_1, %c0_2] : memref<8x128xf32, #tpu.memory_space<vmem>>, vector<8x128xf32>
    %cst = arith.constant dense<0.000000e+00> : vector<8x128xf32>
    %2 = tpu.matmul %0, %1, %cst {dimension_numbers = #tpu.dot_dimension_numbers<[1], [0], [0], [1], [0, 0, 1, 1], [], []>, precision = #tpu.contract_precision<fp32>} : vector<8x8xf32>, vector<8x128xf32>, vector<8x128xf32> -> vector<8x128xf32>
    %c0_3 = arith.constant 0 : index
    %c0_4 = arith.constant 0 : index
    %3 = vector.load %arg3[%c0_3, %c0_4] : memref<1x128xf32, #tpu.memory_space<vmem>>, vector<1x128xf32>
    %4 = vector.broadcast %3 : vector<1x128xf32> to vector<8x128xf32>
    %5 = arith.addf %2, %4 : vector<8x128xf32>
    %6 = math.sin %5 : vector<8x128xf32>
    %c0_5 = arith.constant 0 : index
    %c0_6 = arith.constant 0 : index
    %7 = vector.load %arg4[%c0_5, %c0_6] : memref<8x128xf32, #tpu.memory_space<vmem>>, vector<8x128xf32>
    tpu.vector_store %arg4[%c0_5, %c0_6], %6 {strides = array<i32>} : memref<8x128xf32, #tpu.memory_space<vmem>>, vector<8x128xf32>,
    return
  }
  func.func @transform_0(%arg0: i32) -> (i32, i32) {
    %c0_i32 = arith.constant 0 : i32
    %c0_i32_0 = arith.constant 0 : i32
    return %arg0, %c0_i32 : i32, i32
  }
  func.func @transform_1(%arg0: i32) -> (i32, i32) {
    %c0_i32 = arith.constant 0 : i32
    %c0_i32_0 = arith.constant 0 : i32
    %c0_i32_1 = arith.constant 0 : i32
    return %c0_i32, %c0_i32_0 : i32, i32
  }
  func.func @transform_2(%arg0: i32) -> (i32, i32) {
    %c0_i32 = arith.constant 0 : i32
    %c0_i32_0 = arith.constant 0 : i32
    %c0_i32_1 = arith.constant 0 : i32
    return %c0_i32, %c0_i32_0 : i32, i32
  }
  func.func @transform_3(%arg0: i32) -> (i32, i32) {
    %c0_i32 = arith.constant 0 : i32
    %c0_i32_0 = arith.constant 0 : i32
    return %arg0, %c0_i32 : i32, i32
  }
}

</mosaic_0001>

<llo_original>
// kernel: tile.6
$region0: #{tile.6}
  #allocation0 [shape = 's32[1]{0}', space=sflag, size = 0x4, scoped, tag = 'scoped memory for tile.6']
  %s0 = inlined_call_operand.vmem [shape: f32[64], index: 0, kind: input, shape index: {}]
  %s1 = inlined_call_operand.vmem [shape: f32[2,64], index: 1, kind: output, shape index: {}]
  // Predicated region
  $region2: #{tile.6} parent=0 // pred_check
    _
  $region3: #{tile.6} parent=0 // pred_check_branch
    %3 = sbr.rel (0) target = $region5
  $region4: #{tile.6} parent=0 // pred_region
    _
  $region5: #{tile.6} parent=0 // pred_fallthru
    _
  %v4 = vld [vmem:[%s0] ss:$0 sm:$0xff]
  %5 = vst [vmem:[%s1] sm:$0x3] %v4

// kernel: tile.7
$region0: #{tile.7}
  %s0 = inlined_call_operand.vmem [shape: f32[2,64], index: 0, kind: input, shape index: {}]
  %s1 = inlined_call_operand.vmem [shape: f32[1,128], index: 1, kind: output, shape index: {}]
  $region1: #{tile.7} parent=0
    #allocation0 [shape = 'u8[4096]{0}', space=vmem, size = 0x1000, scoped, tag = 'scoped mem for output reshape']
    #allocation1 [shape = 'u8[4096]{0}', space=vmem, size = 0x1000, scoped, tag = 'scoped mem for input reshape']
    %s3 = sshll.u32 1, 2
    %s4 = ssub.s32 %s3, 1
    %v5 = vld [vmem:[%s0] sm:%s4]
    %6 = vst [vmem:[#allocation1] sm:%s4] %v5
    %v7 = vld [vmem:[#allocation1] sm:$0x1]
    %vm8 = vcmask 523264
    %9 = vst.msk [vmem:[#allocation0] sm:$0x1] %vm8, %v7
    %s10 = scalar_lea.vmem [#allocation1], 1
    %v11 = vld [vmem:[%s10] sm:$0x1]
    %12 = vrot.lane.b32.xlu0 %v11, 64
    %v13 = vpop.permute.xlu0 %12
    %vm14 = vcmask 1048064
    %15 = vst.msk [vmem:[#allocation0] sm:$0x1] %vm14, %v13
    %s17 = sshll.u32 1, 1
    %s18 = ssub.s32 %s17, 1
    %v20 = vld [vmem:[#allocation0] sm:%s18]
    %s21 = sshll.u32 1, 1
    %s22 = ssub.s32 %s21, 1
    %23 = vst [vmem:[%s1] sm:%s22] %v20

// kernel: random_fourier_feature_encode.1
$region0: #{random_fourier_feature_encode.1}
  #allocation0 [shape = 'u32[]', space=smem, size = 0x4, offset = 0x4, fixed_abs, tag = 'smem constant byte address 0x4 - core index']
  #allocation1 [shape = 'u32[144,128]{1,0:T(1,128)}', space=vmem, size = 0x12000, scoped, tag = 'internal scratch']
  %s0 = inlined_call_operand.vmem [shape: f32[8,8], index: 0, kind: input, shape index: {}]
  %s1 = inlined_call_operand.vmem [shape: f32[8,128], index: 1, kind: input, shape index: {}]
  %s2 = inlined_call_operand.vmem [shape: f32[1,128], index: 2, kind: input, shape index: {}]
  %s3 = inlined_call_operand.vmem [shape: f32[8,128], index: 3, kind: output, shape index: {}]
  %s4 = sld [smem:[#allocation0]]
  $region22: #{random_fourier_feature_encode.1} parent=0
    _
  %s6 = ssub.s32 1, %s4
  %s7 = scalar_select 0, %s6, %s4
  // Predicated region
  $region2: #{random_fourier_feature_encode.1} parent=0 // pred_check
    _
  $region3: #{random_fourier_feature_encode.1} parent=0 // pred_check_branch
    %9 = sbr.rel (0) target = $region5
  $region4: #{random_fourier_feature_encode.1} parent=0 // pred_region
    _
  $region5: #{random_fourier_feature_encode.1} parent=0 // pred_fallthru
    _
  // Predicated region
  $region6: #{random_fourier_feature_encode.1} parent=0 // pred_check
    _
  $region7: #{random_fourier_feature_encode.1} parent=0 // pred_check_branch
    %11 = sbr.rel (0) target = $region9
  $region8: #{random_fourier_feature_encode.1} parent=0 // pred_region
    _
  $region9: #{random_fourier_feature_encode.1} parent=0 // pred_fallthru
    _
  // Predicated region
  $region10: #{random_fourier_feature_encode.1} parent=0 // pred_check
    _
  $region11: #{random_fourier_feature_encode.1} parent=0 // pred_check_branch
    %13 = sbr.rel (0) target = $region13
  $region12: #{random_fourier_feature_encode.1} parent=0 // pred_region
    _
  $region13: #{random_fourier_feature_encode.1} parent=0 // pred_fallthru
    _
  %v14 = vld [vmem:[%s0] sm:$0xff]
  %v15 = vld [vmem:[%s1] sm:$0xff]
  %v16 = vld [vmem:[%s2] sm:$0x1]
  %v18 = vlaneseq
  %v19 = vshrl.u32 %v18, 7
  %v20 = vsub.s32 0, %v19
  %v21 = vrot.slane %v16, %v20
  %vm23 = vcmask 64512
  %v25 = vsel %vm23, %v14, 0
  %27 = vmatprep.subr.mxu0 0.0
  %28 = vmatpush1.msra.mxu0 0.0
  %29 = vmatprep.subr.mxu0 0.0
  %30 = vmatpush1.msra.mxu0 0.0
  %31 = vmatprep.subr.mxu0 0.0
  %32 = vmatpush1.msra.mxu0 0.0
  %33 = vmatprep.subr.mxu0 0.0
  %34 = vmatpush1.msra.mxu0 0.0
  %35 = vmatprep.subr.mxu0 0.0
  %36 = vmatpush1.msra.mxu0 0.0
  %37 = vmatprep.subr.mxu0 0.0
  %38 = vmatpush1.msra.mxu0 0.0
  %39 = vmatprep.subr.mxu0 0.0
  %40 = vmatpush1.msra.mxu0 0.0
  %41 = vmatprep.subr.mxu0 0.0
  %42 = vmatpush1.msra.mxu0 0.0
  %43 = vmatprep.subr.mxu0 0.0
  %44 = vmatpush1.msra.mxu0 0.0
  %45 = vmatprep.subr.mxu0 0.0
  %46 = vmatpush1.msra.mxu0 0.0
  %47 = vmatprep.subr.mxu0 0.0
  %48 = vmatpush1.msra.mxu0 0.0
  %49 = vmatprep.subr.mxu0 0.0
  %50 = vmatpush1.msra.mxu0 0.0
  %51 = vmatprep.subr.mxu0 0.0
  %52 = vmatpush1.msra.mxu0 0.0
  %53 = vmatprep.subr.mxu0 0.0
  %54 = vmatpush1.msra.mxu0 0.0
  %55 = vmatprep.subr.mxu0 0.0
  %56 = vmatpush1.msra.mxu0 0.0
  %57 = vmatprep.subr.mxu0 0.0
  %v58 = vand.u32 %v15, 4294901760
  %59 = vmatpush1.msra.mxu0 %v58
  %60 = vmatprep.subr.mxu0 0.0
  %61 = vmatpush2.msra.mxu0 0.0
  %62 = vmatprep.subr.mxu0 0.0
  %63 = vmatpush2.msra.mxu0 0.0
  %64 = vmatprep.subr.mxu0 0.0
  %65 = vmatpush2.msra.mxu0 0.0
  %66 = vmatprep.subr.mxu0 0.0
  %67 = vmatpush2.msra.mxu0 0.0
  %68 = vmatprep.subr.mxu0 0.0
  %69 = vmatpush2.msra.mxu0 0.0
  %70 = vmatprep.subr.mxu0 0.0
  %71 = vmatpush2.msra.mxu0 0.0
  %72 = vmatprep.subr.mxu0 0.0
  %73 = vmatpush2.msra.mxu0 0.0
  %74 = vmatprep.subr.mxu0 0.0
  %75 = vmatpush2.msra.mxu0 0.0
  %76 = vmatprep.subr.mxu0 0.0
  %77 = vmatpush2.msra.mxu0 0.0
  %78 = vmatprep.subr.mxu0 0.0
  %79 = vmatpush2.msra.mxu0 0.0
  %80 = vmatprep.subr.mxu0 0.0
  %81 = vmatpush2.msra.mxu0 0.0
  %82 = vmatprep.subr.mxu0 0.0
  %83 = vmatpush2.msra.mxu0 0.0
  %84 = vmatprep.subr.mxu0 0.0
  %85 = vmatpush2.msra.mxu0 0.0
  %86 = vmatprep.subr.mxu0 0.0
  %87 = vmatpush2.msra.mxu0 0.0
  %88 = vmatprep.subr.mxu0 0.0
  %89 = vmatpush2.msra.mxu0 0.0
  %90 = vmatprep.subr.mxu0 0.0
  %91 = vmatpush2.msra.mxu0 0.0
  %92 = vmatprep.mubr.f32.mxu0 0.0
  %v93 = vand.u32 %v25, 4294901760
  %v94 = vsub.f32 %v25, %v93
  %v95 = vand.u32 %v94, 4294901760
  %v96 = vsub.f32 %v94, %v95
  %v97 = vand.u32 %v96, 4294901760
  %98 = vmatmul.mubr.f32.gmra.mxu0 %v97
  %v99 = vpop.f32.mrf.mxu0
  %v100 = vadd.f32 %v21, %v99
  %v101 = vpop.f32.mrf.mxu0
  %102 = vdwg.mxu0
  %103 = vmatprep.subr.mxu0 0.0
  %104 = vmatpush1.msra.mxu0 0.0
  %105 = vmatprep.subr.mxu0 0.0
  %106 = vmatpush1.msra.mxu0 0.0
  %107 = vmatprep.subr.mxu0 0.0
  %108 = vmatpush1.msra.mxu0 0.0
  %109 = vmatprep.subr.mxu0 0.0
  %110 = vmatpush1.msra.mxu0 0.0
  %111 = vmatprep.subr.mxu0 0.0
  %112 = vmatpush1.msra.mxu0 0.0
  %113 = vmatprep.subr.mxu0 0.0
  %114 = vmatpush1.msra.mxu0 0.0
  %115 = vmatprep.subr.mxu0 0.0
  %116 = vmatpush1.msra.mxu0 0.0
  %117 = vmatprep.subr.mxu0 0.0
  %118 = vmatpush1.msra.mxu0 0.0
  %119 = vmatprep.subr.mxu0 0.0
  %120 = vmatpush1.msra.mxu0 0.0
  %121 = vmatprep.subr.mxu0 0.0
  %122 = vmatpush1.msra.mxu0 0.0
  %123 = vmatprep.subr.mxu0 0.0
  %124 = vmatpush1.msra.mxu0 0.0
  %125 = vmatprep.subr.mxu0 0.0
  %126 = vmatpush1.msra.mxu0 0.0
  %127 = vmatprep.subr.mxu0 0.0
  %128 = vmatpush1.msra.mxu0 0.0
  %129 = vmatprep.subr.mxu0 0.0
  %130 = vmatpush1.msra.mxu0 0.0
  %131 = vmatprep.subr.mxu0 0.0
  %132 = vmatpush1.msra.mxu0 0.0
  %133 = vmatprep.subr.mxu0 0.0
  %v134 = vand.u32 %v15, 4294901760
  %v135 = vsub.f32 %v15, %v134
  %v136 = vand.u32 %v135, 4294901760
  %v137 = vsub.f32 %v135, %v136
  %v138 = vand.u32 %v137, 4294901760
  %139 = vmatpush1.msra.mxu0 %v138
  %140 = vmatprep.subr.mxu0 0.0
  %141 = vmatpush2.msra.mxu0 0.0
  %142 = vmatprep.subr.mxu0 0.0
  %143 = vmatpush2.msra.mxu0 0.0
  %144 = vmatprep.subr.mxu0 0.0
  %145 = vmatpush2.msra.mxu0 0.0
  %146 = vmatprep.subr.mxu0 0.0
  %147 = vmatpush2.msra.mxu0 0.0
  %148 = vmatprep.subr.mxu0 0.0
  %149 = vmatpush2.msra.mxu0 0.0
  %150 = vmatprep.subr.mxu0 0.0
  %151 = vmatpush2.msra.mxu0 0.0
  %152 = vmatprep.subr.mxu0 0.0
  %153 = vmatpush2.msra.mxu0 0.0
  %154 = vmatprep.subr.mxu0 0.0
  %155 = vmatpush2.msra.mxu0 0.0
  %156 = vmatprep.subr.mxu0 0.0
  %157 = vmatpush2.msra.mxu0 0.0
  %158 = vmatprep.subr.mxu0 0.0
  %159 = vmatpush2.msra.mxu0 0.0
  %160 = vmatprep.subr.mxu0 0.0
  %161 = vmatpush2.msra.mxu0 0.0
  %162 = vmatprep.subr.mxu0 0.0
  %163 = vmatpush2.msra.mxu0 0.0
  %164 = vmatprep.subr.mxu0 0.0
  %165 = vmatpush2.msra.mxu0 0.0
  %166 = vmatprep.subr.mxu0 0.0
  %167 = vmatpush2.msra.mxu0 0.0
  %168 = vmatprep.subr.mxu0 0.0
  %169 = vmatpush2.msra.mxu0 0.0
  %170 = vmatprep.subr.mxu0 0.0
  %171 = vmatpush2.msra.mxu0 0.0
  %172 = vmatprep.mubr.f32.mxu0 0.0
  %v173 = vand.u32 %v25, 4294901760
  %174 = vmatmul.mubr.f32.gmra.mxu0 %v173
  %v175 = vpop.f32.mrf.mxu0
  %v176 = vadd.f32 %v100, %v175
  %v177 = vpop.f32.mrf.mxu0
  %178 = vdwg.mxu0
  %179 = vmatprep.subr.mxu0 0.0
  %180 = vmatpush1.msra.mxu0 0.0
  %181 = vmatprep.subr.mxu0 0.0
  %182 = vmatpush1.msra.mxu0 0.0
  %183 = vmatprep.subr.mxu0 0.0
  %184 = vmatpush1.msra.mxu0 0.0
  %185 = vmatprep.subr.mxu0 0.0
  %186 = vmatpush1.msra.mxu0 0.0
  %187 = vmatprep.subr.mxu0 0.0
  %188 = vmatpush1.msra.mxu0 0.0
  %189 = vmatprep.subr.mxu0 0.0
  %190 = vmatpush1.msra.mxu0 0.0
  %191 = vmatprep.subr.mxu0 0.0
  %192 = vmatpush1.msra.mxu0 0.0
  %193 = vmatprep.subr.mxu0 0.0
  %194 = vmatpush1.msra.mxu0 0.0
  %195 = vmatprep.subr.mxu0 0.0
  %196 = vmatpush1.msra.mxu0 0.0
  %197 = vmatprep.subr.mxu0 0.0
  %198 = vmatpush1.msra.mxu0 0.0
  %199 = vmatprep.subr.mxu0 0.0
  %200 = vmatpush1.msra.mxu0 0.0
  %201 = vmatprep.subr.mxu0 0.0
  %202 = vmatpush1.msra.mxu0 0.0
  %203 = vmatprep.subr.mxu0 0.0
  %204 = vmatpush1.msra.mxu0 0.0
  %205 = vmatprep.subr.mxu0 0.0
  %206 = vmatpush1.msra.mxu0 0.0
  %207 = vmatprep.subr.mxu0 0.0
  %208 = vmatpush1.msra.mxu0 0.0
  %209 = vmatprep.subr.mxu0 0.0
  %v210 = vand.u32 %v15, 4294901760
  %v211 = vsub.f32 %v15, %v210
  %212 = vmatpush1.msra.mxu0 %v211
  %213 = vmatprep.subr.mxu0 0.0
  %214 = vmatpush2.msra.mxu0 0.0
  %215 = vmatprep.subr.mxu0 0.0
  %216 = vmatpush2.msra.mxu0 0.0
  %217 = vmatprep.subr.mxu0 0.0
  %218 = vmatpush2.msra.mxu0 0.0
  %219 = vmatprep.subr.mxu0 0.0
  %220 = vmatpush2.msra.mxu0 0.0
  %221 = vmatprep.subr.mxu0 0.0
  %222 = vmatpush2.msra.mxu0 0.0
  %223 = vmatprep.subr.mxu0 0.0
  %224 = vmatpush2.msra.mxu0 0.0
  %225 = vmatprep.subr.mxu0 0.0
  %226 = vmatpush2.msra.mxu0 0.0
  %227 = vmatprep.subr.mxu0 0.0
  %228 = vmatpush2.msra.mxu0 0.0
  %229 = vmatprep.subr.mxu0 0.0
  %230 = vmatpush2.msra.mxu0 0.0
  %231 = vmatprep.subr.mxu0 0.0
  %232 = vmatpush2.msra.mxu0 0.0
  %233 = vmatprep.subr.mxu0 0.0
  %234 = vmatpush2.msra.mxu0 0.0
  %235 = vmatprep.subr.mxu0 0.0
  %236 = vmatpush2.msra.mxu0 0.0
  %237 = vmatprep.subr.mxu0 0.0
  %238 = vmatpush2.msra.mxu0 0.0
  %239 = vmatprep.subr.mxu0 0.0
  %240 = vmatpush2.msra.mxu0 0.0
  %241 = vmatprep.subr.mxu0 0.0
  %242 = vmatpush2.msra.mxu0 0.0
  %243 = vmatprep.subr.mxu0 0.0
  %244 = vmatpush2.msra.mxu0 0.0
  %245 = vmatprep.mubr.f32.mxu0 0.0
  %v246 = vand.u32 %v25, 4294901760
  %v247 = vsub.f32 %v25, %v246
  %248 = vmatmul.mubr.f32.gmra.mxu0 %v247
  %v249 = vpop.f32.mrf.mxu0
  %v250 = vadd.f32 %v176, %v249
  %v251 = vpop.f32.mrf.mxu0
  %252 = vdwg.mxu0
  %253 = vmatprep.subr.mxu0 0.0
  %254 = vmatpush1.msra.mxu0 0.0
  %255 = vmatprep.subr.mxu0 0.0
  %256 = vmatpush1.msra.mxu0 0.0
  %257 = vmatprep.subr.mxu0 0.0
  %258 = vmatpush1.msra.mxu0 0.0
  %259 = vmatprep.subr.mxu0 0.0
  %260 = vmatpush1.msra.mxu0 0.0
  %261 = vmatprep.subr.mxu0 0.0
  %262 = vmatpush1.msra.mxu0 0.0
  %263 = vmatprep.subr.mxu0 0.0
  %264 = vmatpush1.msra.mxu0 0.0
  %265 = vmatprep.subr.mxu0 0.0
  %266 = vmatpush1.msra.mxu0 0.0
  %267 = vmatprep.subr.mxu0 0.0
  %268 = vmatpush1.msra.mxu0 0.0
  %269 = vmatprep.subr.mxu0 0.0
  %270 = vmatpush1.msra.mxu0 0.0
  %271 = vmatprep.subr.mxu0 0.0
  %272 = vmatpush1.msra.mxu0 0.0
  %273 = vmatprep.subr.mxu0 0.0
  %274 = vmatpush1.msra.mxu0 0.0
  %275 = vmatprep.subr.mxu0 0.0
  %276 = vmatpush1.msra.mxu0 0.0
  %277 = vmatprep.subr.mxu0 0.0
  %278 = vmatpush1.msra.mxu0 0.0
  %279 = vmatprep.subr.mxu0 0.0
  %280 = vmatpush1.msra.mxu0 0.0
  %281 = vmatprep.subr.mxu0 0.0
  %282 = vmatpush1.msra.mxu0 0.0
  %283 = vmatprep.subr.mxu0 0.0
  %v284 = vand.u32 %v15, 4294901760
  %285 = vmatpush1.msra.mxu0 %v284
  %286 = vmatprep.subr.mxu0 0.0
  %287 = vmatpush2.msra.mxu0 0.0
  %288 = vmatprep.subr.mxu0 0.0
  %289 = vmatpush2.msra.mxu0 0.0
  %290 = vmatprep.subr.mxu0 0.0
  %291 = vmatpush2.msra.mxu0 0.0
  %292 = vmatprep.subr.mxu0 0.0
  %293 = vmatpush2.msra.mxu0 0.0
  %294 = vmatprep.subr.mxu0 0.0
  %295 = vmatpush2.msra.mxu0 0.0
  %296 = vmatprep.subr.mxu0 0.0
  %297 = vmatpush2.msra.mxu0 0.0
  %298 = vmatprep.subr.mxu0 0.0
  %299 = vmatpush2.msra.mxu0 0.0
  %300 = vmatprep.subr.mxu0 0.0
  %301 = vmatpush2.msra.mxu0 0.0
  %302 = vmatprep.subr.mxu0 0.0
  %303 = vmatpush2.msra.mxu0 0.0
  %304 = vmatprep.subr.mxu0 0.0
  %305 = vmatpush2.msra.mxu0 0.0
  %306 = vmatprep.subr.mxu0 0.0
  %307 = vmatpush2.msra.mxu0 0.0
  %308 = vmatprep.subr.mxu0 0.0
  %309 = vmatpush2.msra.mxu0 0.0
  %310 = vmatprep.subr.mxu0 0.0
  %311 = vmatpush2.msra.mxu0 0.0
  %312 = vmatprep.subr.mxu0 0.0
  %313 = vmatpush2.msra.mxu0 0.0
  %314 = vmatprep.subr.mxu0 0.0
  %315 = vmatpush2.msra.mxu0 0.0
  %316 = vmatprep.subr.mxu0 0.0
  %317 = vmatpush2.msra.mxu0 0.0
  %318 = vmatprep.mubr.f32.mxu0 0.0
  %v319 = vand.u32 %v25, 4294901760
  %v320 = vsub.f32 %v25, %v319
  %v321 = vand.u32 %v320, 4294901760
  %322 = vmatmul.mubr.f32.gmra.mxu0 %v321
  %v323 = vpop.f32.mrf.mxu0
  %v324 = vadd.f32 %v250, %v323
  %v325 = vpop.f32.mrf.mxu0
  %326 = vdwg.mxu0
  %327 = vmatprep.subr.mxu0 0.0
  %328 = vmatpush1.msra.mxu0 0.0
  %329 = vmatprep.subr.mxu0 0.0
  %330 = vmatpush1.msra.mxu0 0.0
  %331 = vmatprep.subr.mxu0 0.0
  %332 = vmatpush1.msra.mxu0 0.0
  %333 = vmatprep.subr.mxu0 0.0
  %334 = vmatpush1.msra.mxu0 0.0
  %335 = vmatprep.subr.mxu0 0.0
  %336 = vmatpush1.msra.mxu0 0.0
  %337 = vmatprep.subr.mxu0 0.0
  %338 = vmatpush1.msra.mxu0 0.0
  %339 = vmatprep.subr.mxu0 0.0
  %340 = vmatpush1.msra.mxu0 0.0
  %341 = vmatprep.subr.mxu0 0.0
  %342 = vmatpush1.msra.mxu0 0.0
  %343 = vmatprep.subr.mxu0 0.0
  %344 = vmatpush1.msra.mxu0 0.0
  %345 = vmatprep.subr.mxu0 0.0
  %346 = vmatpush1.msra.mxu0 0.0
  %347 = vmatprep.subr.mxu0 0.0
  %348 = vmatpush1.msra.mxu0 0.0
  %349 = vmatprep.subr.mxu0 0.0
  %350 = vmatpush1.msra.mxu0 0.0
  %351 = vmatprep.subr.mxu0 0.0
  %352 = vmatpush1.msra.mxu0 0.0
  %353 = vmatprep.subr.mxu0 0.0
  %354 = vmatpush1.msra.mxu0 0.0
  %355 = vmatprep.subr.mxu0 0.0
  %356 = vmatpush1.msra.mxu0 0.0
  %357 = vmatprep.subr.mxu0 0.0
  %v358 = vand.u32 %v15, 4294901760
  %v359 = vsub.f32 %v15, %v358
  %v360 = vand.u32 %v359, 4294901760
  %361 = vmatpush1.msra.mxu0 %v360
  %362 = vmatprep.subr.mxu0 0.0
  %363 = vmatpush2.msra.mxu0 0.0
  %364 = vmatprep.subr.mxu0 0.0
  %365 = vmatpush2.msra.mxu0 0.0
  %366 = vmatprep.subr.mxu0 0.0
  %367 = vmatpush2.msra.mxu0 0.0
  %368 = vmatprep.subr.mxu0 0.0
  %369 = vmatpush2.msra.mxu0 0.0
  %370 = vmatprep.subr.mxu0 0.0
  %371 = vmatpush2.msra.mxu0 0.0
  %372 = vmatprep.subr.mxu0 0.0
  %373 = vmatpush2.msra.mxu0 0.0
  %374 = vmatprep.subr.mxu0 0.0
  %375 = vmatpush2.msra.mxu0 0.0
  %376 = vmatprep.subr.mxu0 0.0
  %377 = vmatpush2.msra.mxu0 0.0
  %378 = vmatprep.subr.mxu0 0.0
  %379 = vmatpush2.msra.mxu0 0.0
  %380 = vmatprep.subr.mxu0 0.0
  %381 = vmatpush2.msra.mxu0 0.0
  %382 = vmatprep.subr.mxu0 0.0
  %383 = vmatpush2.msra.mxu0 0.0
  %384 = vmatprep.subr.mxu0 0.0
  %385 = vmatpush2.msra.mxu0 0.0
  %386 = vmatprep.subr.mxu0 0.0
  %387 = vmatpush2.msra.mxu0 0.0
  %388 = vmatprep.subr.mxu0 0.0
  %389 = vmatpush2.msra.mxu0 0.0
  %390 = vmatprep.subr.mxu0 0.0
  %391 = vmatpush2.msra.mxu0 0.0
  %392 = vmatprep.subr.mxu0 0.0
  %393 = vmatpush2.msra.mxu0 0.0
  %394 = vmatprep.mubr.f32.mxu0 0.0
  %v395 = vand.u32 %v25, 4294901760
  %396 = vmatmul.mubr.f32.gmra.mxu0 %v395
  %v397 = vpop.f32.mrf.mxu0
  %v398 = vadd.f32 %v324, %v397
  %v399 = vpop.f32.mrf.mxu0
  %400 = vdwg.mxu0
  %401 = vmatprep.subr.mxu0 0.0
  %402 = vmatpush1.msra.mxu0 0.0
  %403 = vmatprep.subr.mxu0 0.0
  %404 = vmatpush1.msra.mxu0 0.0
  %405 = vmatprep.subr.mxu0 0.0
  %406 = vmatpush1.msra.mxu0 0.0
  %407 = vmatprep.subr.mxu0 0.0
  %408 = vmatpush1.msra.mxu0 0.0
  %409 = vmatprep.subr.mxu0 0.0
  %410 = vmatpush1.msra.mxu0 0.0
  %411 = vmatprep.subr.mxu0 0.0
  %412 = vmatpush1.msra.mxu0 0.0
  %413 = vmatprep.subr.mxu0 0.0
  %414 = vmatpush1.msra.mxu0 0.0
  %415 = vmatprep.subr.mxu0 0.0
  %416 = vmatpush1.msra.mxu0 0.0
  %417 = vmatprep.subr.mxu0 0.0
  %418 = vmatpush1.msra.mxu0 0.0
  %419 = vmatprep.subr.mxu0 0.0
  %420 = vmatpush1.msra.mxu0 0.0
  %421 = vmatprep.subr.mxu0 0.0
  %422 = vmatpush1.msra.mxu0 0.0
  %423 = vmatprep.subr.mxu0 0.0
  %424 = vmatpush1.msra.mxu0 0.0
  %425 = vmatprep.subr.mxu0 0.0
  %426 = vmatpush1.msra.mxu0 0.0
  %427 = vmatprep.subr.mxu0 0.0
  %428 = vmatpush1.msra.mxu0 0.0
  %429 = vmatprep.subr.mxu0 0.0
  %430 = vmatpush1.msra.mxu0 0.0
  %431 = vmatprep.subr.mxu0 0.0
  %v432 = vand.u32 %v15, 4294901760
  %433 = vmatpush1.msra.mxu0 %v432
  %434 = vmatprep.subr.mxu0 0.0
  %435 = vmatpush2.msra.mxu0 0.0
  %436 = vmatprep.subr.mxu0 0.0
  %437 = vmatpush2.msra.mxu0 0.0
  %438 = vmatprep.subr.mxu0 0.0
  %439 = vmatpush2.msra.mxu0 0.0
  %440 = vmatprep.subr.mxu0 0.0
  %441 = vmatpush2.msra.mxu0 0.0
  %442 = vmatprep.subr.mxu0 0.0
  %443 = vmatpush2.msra.mxu0 0.0
  %444 = vmatprep.subr.mxu0 0.0
  %445 = vmatpush2.msra.mxu0 0.0
  %446 = vmatprep.subr.mxu0 0.0
  %447 = vmatpush2.msra.mxu0 0.0
  %448 = vmatprep.subr.mxu0 0.0
  %449 = vmatpush2.msra.mxu0 0.0
  %450 = vmatprep.subr.mxu0 0.0
  %451 = vmatpush2.msra.mxu0 0.0
  %452 = vmatprep.subr.mxu0 0.0
  %453 = vmatpush2.msra.mxu0 0.0
  %454 = vmatprep.subr.mxu0 0.0
  %455 = vmatpush2.msra.mxu0 0.0
  %456 = vmatprep.subr.mxu0 0.0
  %457 = vmatpush2.msra.mxu0 0.0
  %458 = vmatprep.subr.mxu0 0.0
  %459 = vmatpush2.msra.mxu0 0.0
  %460 = vmatprep.subr.mxu0 0.0
  %461 = vmatpush2.msra.mxu0 0.0
  %462 = vmatprep.subr.mxu0 0.0
  %463 = vmatpush2.msra.mxu0 0.0
  %464 = vmatprep.subr.mxu0 0.0
  %465 = vmatpush2.msra.mxu0 0.0
  %466 = vmatprep.mubr.f32.mxu0 0.0
  %v467 = vand.u32 %v25, 4294901760
  %468 = vmatmul.mubr.f32.gmra.mxu0 %v467
  %v469 = vpop.f32.mrf.mxu0
  %v470 = vadd.f32 %v398, %v469
  %v471 = vpop.f32.mrf.mxu0
  %472 = vdwg.mxu0
  %v473 = vand.u32 2147483647, %v470
  %vm474 = vcmp.le.f32.partialorder %v473, 0.7853982
  %vm475 = vcmp.lt.s32.totalorder %v470, 0
  %v476 = vand.u32 %v470, 2139095040
  %v477 = vshrl.u32 %v476, 23
  %v478 = vsub.s32 %v477, 127
  %v479 = vand.u32 2147483647, %v470
  %v480 = vand.u32 %v479, 8388607
  %v481 = vor.u32 %v480, 8388608
  %v482 = vsub.s32 0, %v481
  %v483 = vadd.s32 %v478, 1
  %vm484 = vcmp.gt.s32.totalorder %v483, 0
  %v485 = vsel %vm484, %v483, 0
  %v486 = vshrl.u32 %v485, 5
  %v487 = vand.u32 %v485, 31
  %v488 = vsub.s32 32, %v487
  %v489 = vshrl.u32 683565275, %v488
  %v490 = vshll.u32 683565275, %v487
  %v491 = vshrl.u32 2475754826, %v488
  %v492 = vor.u32 %v490, %v491
  %v493 = vshll.u32 2475754826, %v487
  %v494 = vshrl.u32 2131351028, %v488
  %v495 = vor.u32 %v493, %v494
  %v496 = vshll.u32 2131351028, %v487
  %v497 = vshrl.u32 2102212464, %v488
  %v498 = vor.u32 %v496, %v497
  %v499 = vshll.u32 2102212464, %v487
  %v500 = vshrl.u32 920167782, %v488
  %v501 = vor.u32 %v499, %v500
  %v502 = vshll.u32 920167782, %v487
  %v503 = vshrl.u32 1326507024, %v488
  %v504 = vor.u32 %v502, %v503
  %vm505 = vcmp.lt.s32.totalorder %v486, 1
  %vm506 = vcmp.lt.s32.totalorder %v486, 2
  %vm507 = vcmp.lt.s32.totalorder %v486, 3
  %vm508 = vcmp.lt.s32.totalorder %v486, 4
  %v509 = vsel %vm505, %v489, %v492
  %v510 = vsel %vm508, %v498, 2102212464
  %v511 = vsel %vm507, %v495, %v510
  %v512 = vsel %vm506, %v509, %v511
  %v513 = vsel %vm505, %v492, %v495
  %v514 = vsel %vm508, %v501, 920167782
  %v515 = vsel %vm507, %v498, %v514
  %v516 = vsel %vm506, %v513, %v515
  %v517 = vsel %vm505, %v495, %v498
  %v518 = vsel %vm508, %v504, 1326507024
  %v519 = vsel %vm507, %v501, %v518
  %v520 = vsel %vm506, %v517, %v519
  %v521 = vshll.u32 %v481, 8
  %v522 = vmul.u32.u64.compose %v521, %v520
  %v523 = vextract.low.u32 %v522
  %v524 = vextract.high.u32 %v522
  %v525 = vmul.u32.u64.compose %v521, %v516
  %v526 = vextract.low.u32 %v525
  %v527 = vextract.high.u32 %v525
  %v528 = vmul.u32 %v521, %v512
  %v529 = vadd.s32 %v524, %v526
  %vm530 = vc.u32 %v524, %v526
  %v531 = vadd.s32 %v527, 1
  %v532 = vsel %vm530, %v531, %v527
  %v533 = vadd.s32 %v528, %v532
  %v534 = vadd.s32 %v533, 536870912
  %v535 = vshrl.u32 %v534, 30
  %v536 = vshll.u32 %v535, 30
  %v537 = vsub.s32 %v533, %v536
  %vm538 = vcmp.lt.s32.totalorder %v537, 0
  %v539 = vsub.s32 0, %v537
  %v540 = vsel %vm538, %v539, %v537
  %v541 = vclz %v540
  %v542 = vsub.s32 %v541, 2
  %vm543 = vcmp.gt.s32.totalorder 0, %v542
  %v544 = vsel %vm543, 0, %v542
  %v545 = vsub.s32 32, %v544
  %v546 = vshll.u32 %v537, %v544
  %v547 = vshrl.u32 %v529, %v545
  %v548 = vor.u32 %v546, %v547
  %v549 = vsub.s32 4294967266, %v544
  %v550 = vadd.s32 %v549, 127
  %v551 = vshll.u32 %v550, 23
  %v552 = vor.u32 4788187, %v551
  %v553 = vand.u32 2147483647, %v552
  %v555 = vcvt.s32.f32 %v548
  %v556 = vmul.f32 %v555, %v553
  %v557 = vxor.u32 %v556, 2147483648
  %v558 = vsel %vm475, %v557, %v556
  %v559 = vsub.s32 4, %v535
  %v560 = vsel %vm475, %v559, %v535
  %v561 = vsel %vm474, %v470, %v558
  %v562 = vsel %vm474, 0, %v560
  %v563 = vcosq.f32.pop %v561
  %v564 = vsinq.f32.pop %v561
  %vm565 = vweird.f32 %v470
  %v566 = vadd.s32 %v562, 3
  %v567 = vand.u32 %v566, 3
  %vm568 = vcmp.lt.s32.totalorder %v567, 2
  %vm569 = vcmp.eq.s32.totalorder %v567, 0
  %v570 = vxor.u32 %v564, 2147483648
  %v571 = vsel %vm569, %v563, %v570
  %vm572 = vcmp.eq.s32.totalorder %v567, 2
  %v573 = vxor.u32 %v563, 2147483648
  %v574 = vsel %vm572, %v573, %v564
  %v575 = vsel %vm568, %v571, %v574
  %v576 = vsel %vm565, nan, %v575
  %577 = vst [vmem:[%s3] sm:$0xff] %v576
  // Predicated region
  $region14: #{random_fourier_feature_encode.1} parent=0 // pred_check
    _
  $region15: #{random_fourier_feature_encode.1} parent=0 // pred_check_branch
    %579 = sbr.rel (0) target = $region17
  $region16: #{random_fourier_feature_encode.1} parent=0 // pred_region
    _
  $region17: #{random_fourier_feature_encode.1} parent=0 // pred_fallthru
    _
  // Predicated region
  $region18: #{random_fourier_feature_encode.1} parent=0 // pred_check
    _
  $region19: #{random_fourier_feature_encode.1} parent=0 // pred_check_branch
    %581 = sbr.rel (0) target = $region21
  $region20: #{random_fourier_feature_encode.1} parent=0 // pred_region
    _
  $region21: #{random_fourier_feature_encode.1} parent=0 // pred_fallthru
    _

</llo_original>
